<compile_context>
chip_gen: v6e
topology: v6e:2x2x1
jax: 0.10.0
libtpu: 0.0.40
codegen_flags: <defaults>
</compile_context>

<pallas_src>
import functools

import jax
import jax.numpy as jnp
from jax.experimental import pallas as pl
from jax.experimental.pallas import tpu as pltpu


def _round_up(x, m):
    return ((x + m - 1) // m) * m


def _mlp_kernel(x_ref, w1_ref, b1_ref, w2_ref, b2_ref, w3_ref, b3_ref, o_ref):
    # MXU operands in bf16 (weights are stored bf16; cast the x tile here);
    # accumulation / bias-add / ReLU stay in f32.
    x = x_ref[...].astype(jnp.bfloat16)
    # Layer 0: Linear(input_dim -> h1_padded) + ReLU
    h1 = jnp.dot(x, w1_ref[...], preferred_element_type=jnp.float32) + b1_ref[...]
    h1 = jnp.maximum(h1, 0.0).astype(jnp.bfloat16)
    # Layer 1: Linear(h1 -> h2_padded) + ReLU
    h2 = jnp.dot(h1, w2_ref[...], preferred_element_type=jnp.float32) + b2_ref[...]
    h2 = jnp.maximum(h2, 0.0).astype(jnp.bfloat16)
    # Output layer: Linear(h2 -> n_cls_padded), no activation
    out = jnp.dot(h2, w3_ref[...], preferred_element_type=jnp.float32) + b3_ref[...]
    o_ref[...] = out.astype(o_ref.dtype)


def prepare_params(params, compute_dtype=jnp.bfloat16):
    """One-time prep: transpose to (in, out), zero-pad every output dim to a
    multiple of 128 lanes, and cast matmul operands to bf16.

    params: PyTorch-layout dict: w1 (h1, in), b1 (1, h1), w2 (h2, h1),
            b2 (1, h2), w3 (n_cls, h2), b3 (1, n_cls).
    """
    h1 = params["w1"].shape[0]
    h2 = params["w2"].shape[0]
    n_cls = params["w3"].shape[0]
    h1p = _round_up(h1, 128)      # 300 -> 384
    h2p = _round_up(h2, 128)      # 100 -> 128
    ncp = _round_up(n_cls, 128)   # lane-dense output stores

    w1t = jnp.pad(params["w1"].T, ((0, 0), (0, h1p - h1))).astype(compute_dtype)
    b1 = jnp.pad(params["b1"].reshape(1, h1), ((0, 0), (0, h1p - h1))).astype(jnp.float32)
    w2t = jnp.pad(params["w2"].T, ((0, h1p - h1), (0, h2p - h2))).astype(compute_dtype)
    b2 = jnp.pad(params["b2"].reshape(1, h2), ((0, 0), (0, h2p - h2))).astype(jnp.float32)
    w3t = jnp.pad(params["w3"].T, ((0, h2p - h2), (0, ncp - n_cls))).astype(compute_dtype)
    b3 = jnp.pad(params["b3"].reshape(1, n_cls), ((0, 0), (0, ncp - n_cls))).astype(jnp.float32)
    return {"w1t": w1t, "b1": b1, "w2t": w2t, "b2": b2, "w3t": w3t, "b3": b3}


@functools.partial(jax.jit, static_argnames=("n_cls", "block_n", "return_padded"))
def noisy_mlp1_forward(x, prepped, n_cls, block_n=1024, return_padded=False):
    """Forward pass of NoisyMLP1.

    x: any shape (N, ...); flattened to (N, input_dim) like x.view(N, -1).
    prepped: output of prepare_params().
    """
    n = x.shape[0]
    x2d = x.reshape(n, -1)
    input_dim = x2d.shape[1]
    h1p = prepped["w1t"].shape[1]
    h2p = prepped["w2t"].shape[1]
    n_out = prepped["w3t"].shape[1]

    # ---- batch tiling: balanced tiles, no wrapper-side padding of x ----------
    # Aim for >=2 tiles (one per v7x TensorCore) and up to 4 tiles for per-core
    # pipelining, never below 8-row tiles.  The boundary tile (n % block != 0)
    # is handled by Pallas's masked boundary reads/writes.
    n_blocks = pl.cdiv(n, block_n)
    target_blocks = max(1, min(4, n // 8))
    n_blocks = max(n_blocks, target_blocks)
    block_eff = _round_up(pl.cdiv(n, n_blocks), 8)
    grid = (pl.cdiv(n, block_eff),)

    full = lambda i: (0, 0)   # weights / biases: one untiled, VMEM-resident block
    # (Single-buffering them via pipeline_mode=pl.Buffered(1) would save <0.5 MiB
    #  of VMEM; left at the default for portability since weights are tiny.)

    # ---- cost / VMEM hints ----------------------------------------------------
    itemsize = x2d.dtype.itemsize
    wbytes = prepped["w1t"].dtype.itemsize
    flops = 2 * n * (input_dim * h1p + h1p * h2p + h2p * n_out)
    weight_bytes = (wbytes * (input_dim * h1p + h1p * h2p + h2p * n_out)
                    + 4 * (h1p + h2p + n_out))
    bytes_accessed = n * itemsize * (input_dim + n_out) + weight_bytes
    cost = pl.CostEstimate(flops=flops, transcendentals=0,
                           bytes_accessed=bytes_accessed)
    # double-buffered x/out tiles + resident weights + f32/bf16 activations
    vmem_needed = (2 * block_eff * itemsize * (input_dim + n_out)
                   + 2 * weight_bytes
                   + block_eff * (h1p + h2p) * (4 + 2))
    vmem_limit = int(min(64 * 1024 * 1024, max(2 * vmem_needed, 16 * 1024 * 1024)))

    out = pl.pallas_call(
        _mlp_kernel,
        out_shape=jax.ShapeDtypeStruct((n, n_out), x2d.dtype),
        grid_spec=pltpu.PrefetchScalarGridSpec(
            num_scalar_prefetch=0,
            grid=grid,
            in_specs=[
                pl.BlockSpec((block_eff, input_dim), lambda i: (i, 0)),
                pl.BlockSpec((input_dim, h1p), full),
                pl.BlockSpec((1, h1p), full),
                pl.BlockSpec((h1p, h2p), full),
                pl.BlockSpec((1, h2p), full),
                pl.BlockSpec((h2p, n_out), full),
                pl.BlockSpec((1, n_out), full),
            ],
            out_specs=pl.BlockSpec((block_eff, n_out), lambda i: (i, 0)),
        ),
        compiler_params=pltpu.CompilerParams(
            dimension_semantics=("parallel",),
            vmem_limit_bytes=vmem_limit,
        ),
        cost_estimate=cost,
    )(x2d, prepped["w1t"], prepped["b1"], prepped["w2t"], prepped["b2"],
      prepped["w3t"], prepped["b3"])

    if return_padded:
        return out            # (n, round_up(n_cls, 128)); skips the slice copy
    return out[:, :n_cls]


def init_params(key, input_dim, n_cls, layer_dims=(300, 100)):
    """Deterministic init mirroring nn.Linear's default U(-1/sqrt(fan_in), +)."""
    dims = [input_dim] + list(layer_dims) + [n_cls]
    params = {}
    keys = jax.random.split(key, 2 * (len(dims) - 1))
    names = ["1", "2", "3"]
    for li, (fan_in, fan_out) in enumerate(zip(dims[:-1], dims[1:])):
        bound = 1.0 / jnp.sqrt(float(fan_in))
        w = jax.random.uniform(keys[2 * li], (fan_out, fan_in),
                               jnp.float32, -bound, bound)
        b = jax.random.uniform(keys[2 * li + 1], (1, fan_out),
                               jnp.float32, -bound, bound)
        params[f"w{names[li]}"] = w
        params[f"b{names[li]}"] = b
    return params


def reference_forward(x, params):
    """Pure-JAX f32 reference matching the PyTorch module semantics."""
    x2d = x.reshape(x.shape[0], -1)
    h1 = jnp.maximum(x2d @ params["w1"].T + params["b1"], 0.0)
    h2 = jnp.maximum(h1 @ params["w2"].T + params["b2"], 0.0)
    return h2 @ params["w3"].T + params["b3"]


if __name__ == "__main__":
    key = jax.random.PRNGKey(0)
    k_x, k_p = jax.random.split(key)

    # Small example: batch=16, NCHW input (16, 1, 8, 8) -> input_dim = 64
    batch, c, h, w = 16, 1, 8, 8
    input_dim = c * h * w
    n_cls = 10
    layer_dims = (300, 100)

    x = jax.random.normal(k_x, (batch, c, h, w), jnp.float32)
    params = init_params(k_p, input_dim, n_cls, layer_dims)
    prepped = prepare_params(params)      # one-time transpose / pad / bf16 cast

    out = noisy_mlp1_forward(x, prepped, n_cls=n_cls)
    out = jax.block_until_ready(out)

    ref = reference_forward(x, params)
    assert out.shape == (batch, n_cls)
    # bf16 MXU operands with f32 accumulation => looser tolerance than pure f32.
    assert jnp.allclose(out, ref, atol=5e-2, rtol=5e-2), "mismatch vs reference"

    print("KERNEL_OK")
</pallas_src>

<mosaic_0001>
module attributes {stable_mosaic.version = 11 : i64} {
  func.func @_mlp_kernel(%arg0: i32, %arg1: memref<8x64xf32, #tpu.memory_space<vmem>>, %arg2: memref<64x384xbf16, #tpu.memory_space<vmem>>, %arg3: memref<1x384xf32, #tpu.memory_space<vmem>>, %arg4: memref<384x128xbf16, #tpu.memory_space<vmem>>, %arg5: memref<1x128xf32, #tpu.memory_space<vmem>>, %arg6: memref<128x128xbf16, #tpu.memory_space<vmem>>, %arg7: memref<1x128xf32, #tpu.memory_space<vmem>>, %arg8: memref<8x128xf32, #tpu.memory_space<vmem>>) attributes {dimension_semantics = [#tpu.dimension_semantics<parallel>], iteration_bounds = array<i64: 2>, scalar_prefetch = 0 : i64, scratch_operands = 0 : i64, tpu.core_type = #tpu.core_type<tc>, window_params = [{transform_indices = @transform_0, window_bounds = array<i64: 8, 64>}, {pipeline_mode = #tpu.pipeline_mode<synchronous>, transform_indices = @transform_1, window_bounds = array<i64: 64, 384>}, {pipeline_mode = #tpu.pipeline_mode<synchronous>, transform_indices = @transform_2, window_bounds = array<i64: 1, 384>}, {pipeline_mode = #tpu.pipeline_mode<synchronous>, transform_indices = @transform_3, window_bounds = array<i64: 384, 128>}, {pipeline_mode = #tpu.pipeline_mode<synchronous>, transform_indices = @transform_4, window_bounds = array<i64: 1, 128>}, {pipeline_mode = #tpu.pipeline_mode<synchronous>, transform_indices = @transform_5, window_bounds = array<i64: 128, 128>}, {pipeline_mode = #tpu.pipeline_mode<synchronous>, transform_indices = @transform_6, window_bounds = array<i64: 1, 128>}, {transform_indices = @transform_7, window_bounds = array<i64: 8, 128>}]} {
    %c0 = arith.constant 0 : index
    %c0_0 = arith.constant 0 : index
    %0 = vector.load %arg1[%c0, %c0_0] : memref<8x64xf32, #tpu.memory_space<vmem>>, vector<8x64xf32>
    %1 = arith.truncf %0 : vector<8x64xf32> to vector<8x64xbf16>
    %c0_1 = arith.constant 0 : index
    %c0_2 = arith.constant 0 : index
    %2 = vector.load %arg2[%c0_1, %c0_2] : memref<64x384xbf16, #tpu.memory_space<vmem>>, vector<64x384xbf16>
    %cst = arith.constant dense<0.000000e+00> : vector<8x384xf32>
    %3 = tpu.matmul %1, %2, %cst {dimension_numbers = #tpu.dot_dimension_numbers<[1], [0], [0], [1], [0, 0, 1, 1], [], []>} : vector<8x64xbf16>, vector<64x384xbf16>, vector<8x384xf32> -> vector<8x384xf32>
    %c0_3 = arith.constant 0 : index
    %c0_4 = arith.constant 0 : index
    %4 = vector.load %arg3[%c0_3, %c0_4] : memref<1x384xf32, #tpu.memory_space<vmem>>, vector<1x384xf32>
    %5 = vector.broadcast %4 : vector<1x384xf32> to vector<8x384xf32>
    %6 = arith.addf %3, %5 : vector<8x384xf32>
    %cst_5 = arith.constant 0.000000e+00 : f32
    %7 = vector.broadcast %cst_5 : f32 to vector<8x384xf32>
    %8 = arith.maximumf %6, %7 : vector<8x384xf32>
    %9 = arith.truncf %8 : vector<8x384xf32> to vector<8x384xbf16>
    %c0_6 = arith.constant 0 : index
    %c0_7 = arith.constant 0 : index
    %10 = vector.load %arg4[%c0_6, %c0_7] : memref<384x128xbf16, #tpu.memory_space<vmem>>, vector<384x128xbf16>
    %cst_8 = arith.constant dense<0.000000e+00> : vector<8x128xf32>
    %11 = tpu.matmul %9, %10, %cst_8 {dimension_numbers = #tpu.dot_dimension_numbers<[1], [0], [0], [1], [0, 0, 1, 1], [], []>} : vector<8x384xbf16>, vector<384x128xbf16>, vector<8x128xf32> -> vector<8x128xf32>
    %c0_9 = arith.constant 0 : index
    %c0_10 = arith.constant 0 : index
    %12 = vector.load %arg5[%c0_9, %c0_10] : memref<1x128xf32, #tpu.memory_space<vmem>>, vector<1x128xf32>
    %13 = vector.broadcast %12 : vector<1x128xf32> to vector<8x128xf32>
    %14 = arith.addf %11, %13 : vector<8x128xf32>
    %cst_11 = arith.constant 0.000000e+00 : f32
    %15 = vector.broadcast %cst_11 : f32 to vector<8x128xf32>
    %16 = arith.maximumf %14, %15 : vector<8x128xf32>
    %17 = arith.truncf %16 : vector<8x128xf32> to vector<8x128xbf16>
    %c0_12 = arith.constant 0 : index
    %c0_13 = arith.constant 0 : index
    %18 = vector.load %arg6[%c0_12, %c0_13] : memref<128x128xbf16, #tpu.memory_space<vmem>>, vector<128x128xbf16>
    %cst_14 = arith.constant dense<0.000000e+00> : vector<8x128xf32>
    %19 = tpu.matmul %17, %18, %cst_14 {dimension_numbers = #tpu.dot_dimension_numbers<[1], [0], [0], [1], [0, 0, 1, 1], [], []>} : vector<8x128xbf16>, vector<128x128xbf16>, vector<8x128xf32> -> vector<8x128xf32>
    %c0_15 = arith.constant 0 : index
    %c0_16 = arith.constant 0 : index
    %20 = vector.load %arg7[%c0_15, %c0_16] : memref<1x128xf32, #tpu.memory_space<vmem>>, vector<1x128xf32>
    %21 = vector.broadcast %20 : vector<1x128xf32> to vector<8x128xf32>
    %22 = arith.addf %19, %21 : vector<8x128xf32>
    %c0_17 = arith.constant 0 : index
    %c0_18 = arith.constant 0 : index
    %23 = vector.load %arg8[%c0_17, %c0_18] : memref<8x128xf32, #tpu.memory_space<vmem>>, vector<8x128xf32>
    tpu.vector_store %arg8[%c0_17, %c0_18], %22 {strides = array<i32>} : memref<8x128xf32, #tpu.memory_space<vmem>>, vector<8x128xf32>,
    return
  }
  func.func @transform_0(%arg0: i32) -> (i32, i32) {
    %c0_i32 = arith.constant 0 : i32
    %c0_i32_0 = arith.constant 0 : i32
    return %arg0, %c0_i32 : i32, i32
  }
  func.func @transform_1(%arg0: i32) -> (i32, i32) {
    %c0_i32 = arith.constant 0 : i32
    %c0_i32_0 = arith.constant 0 : i32
    %c0_i32_1 = arith.constant 0 : i32
    return %c0_i32, %c0_i32_0 : i32, i32
  }
  func.func @transform_2(%arg0: i32) -> (i32, i32) {
    %c0_i32 = arith.constant 0 : i32
    %c0_i32_0 = arith.constant 0 : i32
    %c0_i32_1 = arith.constant 0 : i32
    return %c0_i32, %c0_i32_0 : i32, i32
  }
  func.func @transform_3(%arg0: i32) -> (i32, i32) {
    %c0_i32 = arith.constant 0 : i32
    %c0_i32_0 = arith.constant 0 : i32
    %c0_i32_1 = arith.constant 0 : i32
    return %c0_i32, %c0_i32_0 : i32, i32
  }
  func.func @transform_4(%arg0: i32) -> (i32, i32) {
    %c0_i32 = arith.constant 0 : i32
    %c0_i32_0 = arith.constant 0 : i32
    %c0_i32_1 = arith.constant 0 : i32
    return %c0_i32, %c0_i32_0 : i32, i32
  }
  func.func @transform_5(%arg0: i32) -> (i32, i32) {
    %c0_i32 = arith.constant 0 : i32
    %c0_i32_0 = arith.constant 0 : i32
    %c0_i32_1 = arith.constant 0 : i32
    return %c0_i32, %c0_i32_0 : i32, i32
  }
  func.func @transform_6(%arg0: i32) -> (i32, i32) {
    %c0_i32 = arith.constant 0 : i32
    %c0_i32_0 = arith.constant 0 : i32
    %c0_i32_1 = arith.constant 0 : i32
    return %c0_i32, %c0_i32_0 : i32, i32
  }
  func.func @transform_7(%arg0: i32) -> (i32, i32) {
    %c0_i32 = arith.constant 0 : i32
    %c0_i32_0 = arith.constant 0 : i32
    return %arg0, %c0_i32 : i32, i32
  }
}

</mosaic_0001>

<llo_original>
// kernel: noisy_mlp1_forward.1
$region0: #{noisy_mlp1_forward.1}
  #allocation0 [shape = 'u32[]', space=smem, size = 0x4, offset = 0x4, fixed_abs, tag = 'smem constant byte address 0x4 - core index']
  #allocation1 [shape = 'u32[144,128]{1,0:T(1,128)}', space=vmem, size = 0x12000, scoped, tag = 'internal scratch']
  %s0 = inlined_call_operand.vmem [shape: f32[16,64], index: 0, kind: input, shape index: {}]
  %s1 = inlined_call_operand.hbm [shape: bf16[64,384], index: 1, kind: input, shape index: {}]
  %s2 = inlined_call_operand.vmem [shape: f32[1,384], index: 2, kind: input, shape index: {}]
  %s3 = inlined_call_operand.hbm [shape: bf16[384,128], index: 3, kind: input, shape index: {}]
  %s4 = inlined_call_operand.vmem [shape: f32[1,128], index: 4, kind: input, shape index: {}]
  %s5 = inlined_call_operand.vmem [shape: bf16[128,128], index: 5, kind: input, shape index: {}]
  %s6 = inlined_call_operand.vmem [shape: f32[1,128], index: 6, kind: input, shape index: {}]
  %s7 = inlined_call_operand.hbm [shape: f32[16,128], index: 7, kind: output, shape index: {}]
  %s8 = sld [smem:[#allocation0]]
  $region69: #{noisy_mlp1_forward.1} parent=0
    _
  %s10 = ssub.s32 1, %s8
  %s11 = scalar_select 0, %s10, %s8
  $region1: #{noisy_mlp1_forward.1} parent=0
    #allocation2 [shape = 'u8[49152]{0}', space=vmem, size = 0xc000, scoped, tag = 'input window, operand 1, single buffered']
    #allocation3 [shape = 's32[2]{0}', space=sflag, size = 0x8, scoped, tag = 'scoped memory for noisy_mlp1_forward.1']
    #allocation4 [shape = 's32[2]{0}', space=sflag, size = 0x8, scoped, tag = 'scoped memory for noisy_mlp1_forward.1']
    #allocation5 [shape = 'u8[98304]{0}', space=vmem, size = 0x18000, scoped, tag = 'input window, operand 3, single buffered']
    #allocation6 [shape = 's32[1]{0}', space=sflag, size = 0x4, scoped, tag = 'scoped memory for noisy_mlp1_forward.1']
    #allocation7 [shape = 'u8[8192]{0}', space=vmem, size = 0x2000, scoped, tag = 'output window, operand 0']
    %12 = vsyncpa [#allocation3], 0
    %13 = vsyncpa [#allocation6], 0
    %14 = vsyncpa [#allocation4], 0
    %s15 = scalar_lea.sflag [#allocation4], 1
    %16 = vsyncpa %s15, 0
    loop: start=0, step=1, limit=4
    $region2: #{noisy_mlp1_forward.1} parent=1 // loop_pre_header
      _
    $region3: #{noisy_mlp1_forward.1} parent=1 // loop_header
      %s18 = sphi 0, %s22
      %p19 = scmp.ge.s32.totalorder %s18, 4
      %s28 = sphi 0, %s30
      %s31 = sphi 0, %s28
      %s32 = sphi 0, %s31
      %s48 = sphi 0, %s32
      %s52 = sphi 0, %s52
      %s54 = sphi 0, %s52
      %s55 = sphi 0, %s54
      %s69 = sphi 0, %s55
      %s73 = sphi 0, %s73
      %s75 = sphi 0, %s73
      %s76 = sphi 0, %s75
      %s90 = sphi 0, %s76
      %s94 = sphi 0, %s94
      %s96 = sphi 0, %s94
      %s97 = sphi 0, %s96
      %s111 = sphi 0, %s97
      %s115 = sphi 0, %s115
      %s117 = sphi 0, %s115
      %s118 = sphi 0, %s117
      %s132 = sphi 0, %s118
      %s136 = sphi 0, %s136
      %s138 = sphi 0, %s136
      %s139 = sphi 0, %s138
      %s153 = sphi 0, %s139
      %s157 = sphi 0, %s157
      %s159 = sphi 0, %s157
      %s160 = sphi 0, %s159
      %s174 = sphi 0, %s160
      %s180 = sphi 0, %s182
      %s183 = sphi 0, %s180
      %s184 = sphi 0, %s183
      %s200 = sphi 0, %s184
    $region4: #{noisy_mlp1_forward.1} parent=1 // loop_header_branch
      %21 = sbr.rel (%p19) target = $region8
    $region5: #{noisy_mlp1_forward.1} parent=1 // loop_body
      %s23 = ssub.s32 %s18, 1
      %s24 = ssub.s32 %s18, 2
      %s25 = sadd.s32 %s18, 1
      %s26 = ssub.s32 %s18, %s25
      %p27 = scmp.eq.s32.totalorder %s26, 0
      %s29 = sadd.s32 %s28, 1
      %s30 = scalar_select %p27, %s28, %s29
      %p33 = pneg %p27
      %p34 = scmp.eq.s32.totalorder %s18, 1
      %p35 = por %p33, %p34
      %p36 = scmp.ne.s32.totalorder %s28, %s31
      %p37 = scmp.eq.s32.totalorder %s18, 0
      %p38 = por %p36, %p37
      %p39 = scmp.ne.s32.totalorder %s28, %s31
      %p40 = scmp.eq.s32.totalorder %s23, 1
      %p41 = por %p39, %p40
      %p42 = scmp.ne.s32.totalorder %s31, %s32
      %p43 = scmp.eq.s32.totalorder %s23, 0
      %p44 = por %p42, %p43
      %p45 = scmp.ne.s32.totalorder %s31, %s32
      %p46 = scmp.eq.s32.totalorder %s24, 1
      %p47 = por %p45, %p46
      %p49 = scmp.ne.s32.totalorder %s32, %s48
      %p50 = scmp.eq.s32.totalorder %s24, 0
      %p51 = por %p49, %p50
      %s53 = sadd.s32 %s52, 1
      %p56 = scmp.eq.s32.totalorder %s18, 1
      %p57 = scmp.ne.s32.totalorder %s52, %s54
      %p58 = scmp.eq.s32.totalorder %s18, 0
      %p59 = por %p57, %p58
      %p60 = scmp.ne.s32.totalorder %s52, %s54
      %p61 = scmp.eq.s32.totalorder %s23, 1
      %p62 = por %p60, %p61
      %p63 = scmp.ne.s32.totalorder %s54, %s55
      %p64 = scmp.eq.s32.totalorder %s23, 0
      %p65 = por %p63, %p64
      %p66 = scmp.ne.s32.totalorder %s54, %s55
      %p67 = scmp.eq.s32.totalorder %s24, 1
      %p68 = por %p66, %p67
      %p70 = scmp.ne.s32.totalorder %s55, %s69
      %p71 = scmp.eq.s32.totalorder %s24, 0
      %p72 = por %p70, %p71
      %s74 = sadd.s32 %s73, 1
      %p77 = scmp.eq.s32.totalorder %s18, 1
      %p78 = scmp.ne.s32.totalorder %s73, %s75
      %p79 = scmp.eq.s32.totalorder %s18, 0
      %p80 = por %p78, %p79
      %p81 = scmp.ne.s32.totalorder %s73, %s75
      %p82 = scmp.eq.s32.totalorder %s23, 1
      %p83 = por %p81, %p82
      %p84 = scmp.ne.s32.totalorder %s75, %s76
      %p85 = scmp.eq.s32.totalorder %s23, 0
      %p86 = por %p84, %p85
      %p87 = scmp.ne.s32.totalorder %s75, %s76
      %p88 = scmp.eq.s32.totalorder %s24, 1
      %p89 = por %p87, %p88
      %p91 = scmp.ne.s32.totalorder %s76, %s90
      %p92 = scmp.eq.s32.totalorder %s24, 0
      %p93 = por %p91, %p92
      %s95 = sadd.s32 %s94, 1
      %p98 = scmp.eq.s32.totalorder %s18, 1
      %p99 = scmp.ne.s32.totalorder %s94, %s96
      %p100 = scmp.eq.s32.totalorder %s18, 0
      %p101 = por %p99, %p100
      %p102 = scmp.ne.s32.totalorder %s94, %s96
      %p103 = scmp.eq.s32.totalorder %s23, 1
      %p104 = por %p102, %p103
      %p105 = scmp.ne.s32.totalorder %s96, %s97
      %p106 = scmp.eq.s32.totalorder %s23, 0
      %p107 = por %p105, %p106
      %p108 = scmp.ne.s32.totalorder %s96, %s97
      %p109 = scmp.eq.s32.totalorder %s24, 1
      %p110 = por %p108, %p109
      %p112 = scmp.ne.s32.totalorder %s97, %s111
      %p113 = scmp.eq.s32.totalorder %s24, 0
      %p114 = por %p112, %p113
      %s116 = sadd.s32 %s115, 1
      %p119 = scmp.eq.s32.totalorder %s18, 1
      %p120 = scmp.ne.s32.totalorder %s115, %s117
      %p121 = scmp.eq.s32.totalorder %s18, 0
      %p122 = por %p120, %p121
      %p123 = scmp.ne.s32.totalorder %s115, %s117
      %p124 = scmp.eq.s32.totalorder %s23, 1
      %p125 = por %p123, %p124
      %p126 = scmp.ne.s32.totalorder %s117, %s118
      %p127 = scmp.eq.s32.totalorder %s23, 0
      %p128 = por %p126, %p127
      %p129 = scmp.ne.s32.totalorder %s117, %s118
      %p130 = scmp.eq.s32.totalorder %s24, 1
      %p131 = por %p129, %p130
      %p133 = scmp.ne.s32.totalorder %s118, %s132
      %p134 = scmp.eq.s32.totalorder %s24, 0
      %p135 = por %p133, %p134
      %s137 = sadd.s32 %s136, 1
      %p140 = scmp.eq.s32.totalorder %s18, 1
      %p141 = scmp.ne.s32.totalorder %s136, %s138
      %p142 = scmp.eq.s32.totalorder %s18, 0
      %p143 = por %p141, %p142
      %p144 = scmp.ne.s32.totalorder %s136, %s138
      %p145 = scmp.eq.s32.totalorder %s23, 1
      %p146 = por %p144, %p145
      %p147 = scmp.ne.s32.totalorder %s138, %s139
      %p148 = scmp.eq.s32.totalorder %s23, 0
      %p149 = por %p147, %p148
      %p150 = scmp.ne.s32.totalorder %s138, %s139
      %p151 = scmp.eq.s32.totalorder %s24, 1
      %p152 = por %p150, %p151
      %p154 = scmp.ne.s32.totalorder %s139, %s153
      %p155 = scmp.eq.s32.totalorder %s24, 0
      %p156 = por %p154, %p155
      %s158 = sadd.s32 %s157, 1
      %p161 = scmp.eq.s32.totalorder %s18, 1
      %p162 = scmp.ne.s32.totalorder %s157, %s159
      %p163 = scmp.eq.s32.totalorder %s18, 0
      %p164 = por %p162, %p163
      %p165 = scmp.ne.s32.totalorder %s157, %s159
      %p166 = scmp.eq.s32.totalorder %s23, 1
      %p167 = por %p165, %p166
      %p168 = scmp.ne.s32.totalorder %s159, %s160
      %p169 = scmp.eq.s32.totalorder %s23, 0
      %p170 = por %p168, %p169
      %p171 = scmp.ne.s32.totalorder %s159, %s160
      %p172 = scmp.eq.s32.totalorder %s24, 1
      %p173 = por %p171, %p172
      %p175 = scmp.ne.s32.totalorder %s160, %s174
      %p176 = scmp.eq.s32.totalorder %s24, 0
      %p177 = por %p175, %p176
      %s178 = ssub.s32 %s18, %s25
      %p179 = scmp.eq.s32.totalorder %s178, 0
      %s181 = sadd.s32 %s180, 1
      %s182 = scalar_select %p179, %s180, %s181
      %p185 = pneg %p179
      %p186 = scmp.eq.s32.totalorder %s18, 1
      %p187 = por %p185, %p186
      %p188 = scmp.ne.s32.totalorder %s180, %s183
      %p189 = scmp.eq.s32.totalorder %s18, 0
      %p190 = por %p188, %p189
      %p191 = scmp.ne.s32.totalorder %s180, %s183
      %p192 = scmp.eq.s32.totalorder %s23, 1
      %p193 = por %p191, %p192
      %p194 = scmp.ne.s32.totalorder %s183, %s184
      %p195 = scmp.eq.s32.totalorder %s23, 0
      %p196 = por %p194, %p195
      %p197 = scmp.ne.s32.totalorder %s183, %s184
      %p198 = scmp.eq.s32.totalorder %s24, 1
      %p199 = por %p197, %p198
      %p201 = scmp.ne.s32.totalorder %s184, %s200
      %p202 = scmp.eq.s32.totalorder %s24, 0
      %p203 = por %p201, %p202
      %p204 = scmp.le.s32.totalorder 1, %s18
      %p205 = scmp.lt.s32.totalorder %s18, 3
      %p206 = pnand %p204, %p205
      %p207 = pneg %p206
      // Predicated region
      $region9: #{noisy_mlp1_forward.1} parent=5 // pred_check
        _
      $region10: #{noisy_mlp1_forward.1} parent=5 // pred_check_branch
        %209 = sbr.rel (%p206) target = $region12
      $region11: #{noisy_mlp1_forward.1} parent=5 // pred_region
        %s210 = ssub.s32 %s18, 1
        // Predicated region
        $region13: #{noisy_mlp1_forward.1} parent=11 // pred_check
          %p211 = pneg %p65
        $region14: #{noisy_mlp1_forward.1} parent=11 // pred_check_branch
          %213 = sbr.rel (%p211) target = $region16
        $region15: #{noisy_mlp1_forward.1} parent=11 // pred_region
          %s215 = ssub.s32 1536, 1536
          %216 = vsyncadd [#allocation3], %s215
          %s217 = sshll.u32 [#allocation2], 4
          %s218 = int_to_ptr.vmem [resolvable:$true] %s217
          %223 = dma.hbm_to_vmem [thread:$0]  %s1, 1536, %s218, [#allocation3], 192, 192, 12
        $region16: #{noisy_mlp1_forward.1} parent=11 // pred_fallthru
          _
        // Predicated region
        $region17: #{noisy_mlp1_forward.1} parent=11 // pred_check
          %p224 = pneg %p86
        $region18: #{noisy_mlp1_forward.1} parent=11 // pred_check_branch
          %226 = sbr.rel (%p224) target = $region20
        $region19: #{noisy_mlp1_forward.1} parent=11 // pred_region
          _
        $region20: #{noisy_mlp1_forward.1} parent=11 // pred_fallthru
          _
        // Predicated region
        $region21: #{noisy_mlp1_forward.1} parent=11 // pred_check
          %p227 = pneg %p107
        $region22: #{noisy_mlp1_forward.1} parent=11 // pred_check_branch
          %229 = sbr.rel (%p227) target = $region24
        $region23: #{noisy_mlp1_forward.1} parent=11 // pred_region
          %s231 = ssub.s32 3072, 3072
          %232 = vsyncadd [#allocation6], %s231
          %s233 = sshll.u32 [#allocation5], 4
          %s234 = int_to_ptr.vmem [resolvable:$true] %s233
          %239 = dma.hbm_to_vmem [thread:$0]  %s3, 3072, %s234, [#allocation6], 64, 64, 4
        $region24: #{noisy_mlp1_forward.1} parent=11 // pred_fallthru
          _
        // Predicated region
        $region25: #{noisy_mlp1_forward.1} parent=11 // pred_check
          %p240 = pneg %p128
        $region26: #{noisy_mlp1_forward.1} parent=11 // pred_check_branch
          %242 = sbr.rel (%p240) target = $region28
        $region27: #{noisy_mlp1_forward.1} parent=11 // pred_region
          _
        $region28: #{noisy_mlp1_forward.1} parent=11 // pred_fallthru
          _
        // Predicated region
        $region29: #{noisy_mlp1_forward.1} parent=11 // pred_check
          %p243 = pneg %p149
        $region30: #{noisy_mlp1_forward.1} parent=11 // pred_check_branch
          %245 = sbr.rel (%p243) target = $region32
        $region31: #{noisy_mlp1_forward.1} parent=11 // pred_region
          _
        $region32: #{noisy_mlp1_forward.1} parent=11 // pred_fallthru
          _
        // Predicated region
        $region33: #{noisy_mlp1_forward.1} parent=11 // pred_check
          %p246 = pneg %p170
        $region34: #{noisy_mlp1_forward.1} parent=11 // pred_check_branch
          %248 = sbr.rel (%p246) target = $region36
        $region35: #{noisy_mlp1_forward.1} parent=11 // pred_region
          _
        $region36: #{noisy_mlp1_forward.1} parent=11 // pred_fallthru
          _
      $region12: #{noisy_mlp1_forward.1} parent=5 // pred_fallthru
        _
      %p249 = scmp.lt.s32.totalorder %s18, 2
      // Predicated region
      $region37: #{noisy_mlp1_forward.1} parent=5 // pred_check
        %p250 = pneg %p249
      $region38: #{noisy_mlp1_forward.1} parent=5 // pred_check_branch
        %252 = sbr.rel (%p250) target = $region40
      $region39: #{noisy_mlp1_forward.1} parent=5 // pred_region
        // Predicated region
        $region41: #{noisy_mlp1_forward.1} parent=39 // pred_check
          %p253 = pneg %p38
        $region42: #{noisy_mlp1_forward.1} parent=39 // pred_check_branch
          %255 = sbr.rel (%p253) target = $region44
        $region43: #{noisy_mlp1_forward.1} parent=39 // pred_region
          %p256 = scmp.lt.s32.totalorder %s18, 1
          %s257 = scalar_select %p256, %s18, 1
          %s258 = smul.addr %s257, 8
          %s259 = scalar_lea.vmem %s0, %s258
        $region44: #{noisy_mlp1_forward.1} parent=39 // pred_fallthru
          _
      $region40: #{noisy_mlp1_forward.1} parent=5 // pred_fallthru
        _
      %p260 = scmp.le.s32.totalorder 1, %s18
      %p261 = scmp.lt.s32.totalorder %s18, 3
      %p262 = pnand %p260, %p261
      %p263 = pneg %p262
      // Predicated region
      $region45: #{noisy_mlp1_forward.1} parent=5 // pred_check
        _
      $region46: #{noisy_mlp1_forward.1} parent=5 // pred_check_branch
        %265 = sbr.rel (%p262) target = $region48
      $region47: #{noisy_mlp1_forward.1} parent=5 // pred_region
        %s266 = ssub.s32 %s18, 1
        // Predicated region
        $region49: #{noisy_mlp1_forward.1} parent=47 // pred_check
          %p267 = pneg %p65
        $region50: #{noisy_mlp1_forward.1} parent=47 // pred_check_branch
          %269 = sbr.rel (%p267) target = $region52
        $region51: #{noisy_mlp1_forward.1} parent=47 // pred_region
          %270 = dma.done [#allocation3], 1536
        $region52: #{noisy_mlp1_forward.1} parent=47 // pred_fallthru
          _
        // Predicated region
        $region53: #{noisy_mlp1_forward.1} parent=47 // pred_check
          %p271 = pneg %p107
        $region54: #{noisy_mlp1_forward.1} parent=47 // pred_check_branch
          %273 = sbr.rel (%p271) target = $region56
        $region55: #{noisy_mlp1_forward.1} parent=47 // pred_region
          %274 = dma.done [#allocation6], 3072
        $region56: #{noisy_mlp1_forward.1} parent=47 // pred_fallthru
          _
        %p275 = scmp.lt.s32.totalorder %s23, 1
        %s276 = scalar_select %p275, %s23, 1
        %s277 = smul.addr %s276, 8
        %s278 = scalar_lea.vmem %s0, %s277
        %p279 = pneg %p44
        %p280 = pneg %p41
        %p281 = pneg %p65
        %p282 = pneg %p62
        %p283 = pneg %p86
        %p284 = pneg %p83
        %p285 = pneg %p107
        %p286 = pneg %p104
        %p287 = pneg %p128
        %p288 = pneg %p125
        %p289 = pneg %p149
        %p290 = pneg %p146
        %p291 = pneg %p170
        %p292 = pneg %p167
        %p293 = pneg %p196
        %p294 = pneg %p193
        %s295 = sand.u32 %s183, 1
        %s296 = scalar_lea.sflag [#allocation4], %s295
        %s297 = sand.u32 %s183, 1
        %s298 = smul.addr %s297, 8
        %s299 = scalar_lea.vmem [#allocation7], %s298
        %p300 = scmp.lt.s32.totalorder %s23, 1
        %s301 = scalar_select %p300, %s23, 1
        %s302 = smul.addr %s301, 8
        %s303 = scalar_lea.vmem %s0, %s302
        %v305 = vld [vmem:[%s303] sm:$0xff]
        %v306 = vpack.c.bf16 %v305, %v305
        %v307 = vld [vmem:[#allocation2] sm:$0xff]
        %v308 = vld [vmem:[#allocation2 + $0x8] sm:$0xf]
        %v309 = vld [vmem:[#allocation2 + $0xc] sm:$0xff]
        %v310 = vld [vmem:[#allocation2 + $0x14] sm:$0xf]
        %v311 = vld [vmem:[#allocation2 + $0x18] sm:$0xff]
        %v312 = vld [vmem:[#allocation2 + $0x20] sm:$0xf]
        %v313 = vld [vmem:[#allocation2 + $0x24] sm:$0xff]
        %v314 = vld [vmem:[#allocation2 + $0x2c] sm:$0xf]
        %v315 = vld [vmem:[#allocation2 + $0x30] sm:$0xff]
        %v316 = vld [vmem:[#allocation2 + $0x38] sm:$0xf]
        %v317 = vld [vmem:[#allocation2 + $0x3c] sm:$0xff]
        %v318 = vld [vmem:[#allocation2 + $0x44] sm:$0xf]
        %v319 = vld [vmem:[#allocation2 + $0x48] sm:$0xff]
        %v320 = vld [vmem:[#allocation2 + $0x50] sm:$0xf]
        %v321 = vld [vmem:[#allocation2 + $0x54] sm:$0xff]
        %v322 = vld [vmem:[#allocation2 + $0x5c] sm:$0xf]
        %v323 = vld [vmem:[%s2] sm:$0x7]
        %v325 = vlaneseq
        %v326 = vshrl.u32 %v325, 7
        %v327 = vsub.s32 0, %v326
        %v328 = vrot.slane %v323, %v327
        %v329 = vlaneseq
        %v330 = vshrl.u32 %v329, 7
        %v331 = vsub.s32 1, %v330
        %v332 = vrot.slane %v323, %v331
        %v333 = vlaneseq
        %v334 = vshrl.u32 %v333, 7
        %v335 = vsub.s32 2, %v334
        %v336 = vrot.slane %v323, %v335
        %v356 = vunpack.c.l.b16 %v307
        %v357 = vunpack.c.h.b16 %v307
        %v358 = vunpack.c.l.b16 %v308
        %v359 = vunpack.c.l.b16 %v309
        %v360 = vunpack.c.h.b16 %v309
        %v361 = vunpack.c.l.b16 %v310
        %v362 = vunpack.c.l.b16 %v311
        %v363 = vunpack.c.h.b16 %v311
        %v364 = vunpack.c.l.b16 %v312
        %v365 = vunpack.c.l.b16 %v313
        %v366 = vunpack.c.h.b16 %v313
        %v367 = vunpack.c.l.b16 %v314
        %v368 = vunpack.c.l.b16 %v315
        %v369 = vunpack.c.h.b16 %v315
        %v370 = vunpack.c.l.b16 %v316
        %v371 = vunpack.c.l.b16 %v317
        %v372 = vunpack.c.h.b16 %v317
        %v373 = vunpack.c.l.b16 %v318
        %v374 = vunpack.c.l.b16 %v319
        %v375 = vunpack.c.h.b16 %v319
        %v376 = vunpack.c.l.b16 %v320
        %v377 = vunpack.c.l.b16 %v321
        %v378 = vunpack.c.h.b16 %v321
        %v379 = vunpack.c.l.b16 %v322
        %v380 = vpack.c.b16 %v359, %v356
        %v381 = vpack.c.b16 %v360, %v357
        %v382 = vpack.c.b16 %v361, %v358
        %v383 = vpack.c.b16 %v365, %v362
        %v384 = vpack.c.b16 %v366, %v363
        %v385 = vpack.c.b16 %v367, %v364
        %v386 = vpack.c.b16 %v371, %v368
        %v387 = vpack.c.b16 %v372, %v369
        %v388 = vpack.c.b16 %v373, %v370
        %v389 = vpack.c.b16 %v377, %v374
        %v390 = vpack.c.b16 %v378, %v375
        %v391 = vpack.c.b16 %v379, %v376
        %vm404 = vcmask 523264
        %v406 = vsel %vm404, %v306, 0
        %408 = vmatprep.subr.bf16.mxu0 0
        %409 = vmatpush1.bf16.msra.mxu0 0
        %410 = vmatprep.subr.bf16.mxu0 0
        %411 = vmatpush1.bf16.msra.mxu0 0
        %412 = vmatprep.subr.bf16.mxu0 0
        %413 = vmatpush1.bf16.msra.mxu0 0
        %414 = vmatprep.subr.bf16.mxu0 0
        %415 = vmatpush1.bf16.msra.mxu0 0
        %416 = vmatprep.subr.bf16.mxu0 %v390
        %417 = vmatpush1.bf16.msra.mxu0 %v389
        %418 = vmatprep.subr.bf16.mxu0 %v387
        %419 = vmatpush1.bf16.msra.mxu0 %v386
        %420 = vmatprep.subr.bf16.mxu0 %v384
        %421 = vmatpush1.bf16.msra.mxu0 %v383
        %422 = vmatprep.subr.bf16.mxu0 %v381
        %423 = vmatpush1.bf16.msra.mxu0 %v380
        %424 = vmatprep.subr.bf16.mxu0 0
        %425 = vmatpush2.bf16.msra.mxu0 0
        %426 = vmatprep.subr.bf16.mxu0 0
        %427 = vmatpush2.bf16.msra.mxu0 0
        %428 = vmatprep.subr.bf16.mxu0 0
        %429 = vmatpush2.bf16.msra.mxu0 0
        %430 = vmatprep.subr.bf16.mxu0 0
        %431 = vmatpush2.bf16.msra.mxu0 0
        %432 = vmatprep.subr.bf16.mxu0 0
        %433 = vmatpush2.bf16.msra.mxu0 0
        %434 = vmatprep.subr.bf16.mxu0 0
        %435 = vmatpush2.bf16.msra.mxu0 0
        %436 = vmatprep.subr.bf16.mxu0 0
        %437 = vmatpush2.bf16.msra.mxu0 0
        %438 = vmatprep.subr.bf16.mxu0 0
        %439 = vmatpush2.bf16.msra.mxu0 0
        %440 = vmatprep.mubr.bf16.mxu0 0
        %441 = vmatmul.mubr.bf16.gmra.mxu0 %v406
        %v442 = vpop.f32.mrf.mxu0
        %v443 = vadd.f32 %v328, %v442
        %v444 = vpop.f32.mrf.mxu0
        %v445 = vadd.f32 %v332, %v444
        %v446 = vpop.f32.mrf.mxu0
        %v447 = vpop.f32.mrf.mxu0
        %448 = vdwg.mxu0
        %449 = vmatprep.subr.bf16.mxu0 0
        %450 = vmatpush1.bf16.msra.mxu0 0
        %451 = vmatprep.subr.bf16.mxu0 0
        %452 = vmatpush1.bf16.msra.mxu0 0
        %453 = vmatprep.subr.bf16.mxu0 0
        %454 = vmatpush1.bf16.msra.mxu0 0
        %455 = vmatprep.subr.bf16.mxu0 0
        %456 = vmatpush1.bf16.msra.mxu0 0
        %457 = vmatprep.subr.bf16.mxu0 0
        %458 = vmatpush1.bf16.msra.mxu0 %v391
        %459 = vmatprep.subr.bf16.mxu0 0
        %460 = vmatpush1.bf16.msra.mxu0 %v388
        %461 = vmatprep.subr.bf16.mxu0 0
        %462 = vmatpush1.bf16.msra.mxu0 %v385
        %463 = vmatprep.subr.bf16.mxu0 0
        %464 = vmatpush1.bf16.msra.mxu0 %v382
        %465 = vmatprep.subr.bf16.mxu0 0
        %466 = vmatpush2.bf16.msra.mxu0 0
        %467 = vmatprep.subr.bf16.mxu0 0
        %468 = vmatpush2.bf16.msra.mxu0 0
        %469 = vmatprep.subr.bf16.mxu0 0
        %470 = vmatpush2.bf16.msra.mxu0 0
        %471 = vmatprep.subr.bf16.mxu0 0
        %472 = vmatpush2.bf16.msra.mxu0 0
        %473 = vmatprep.subr.bf16.mxu0 0
        %474 = vmatpush2.bf16.msra.mxu0 0
        %475 = vmatprep.subr.bf16.mxu0 0
        %476 = vmatpush2.bf16.msra.mxu0 0
        %477 = vmatprep.subr.bf16.mxu0 0
        %478 = vmatpush2.bf16.msra.mxu0 0
        %479 = vmatprep.subr.bf16.mxu0 0
        %480 = vmatpush2.bf16.msra.mxu0 0
        %481 = vmatprep.mubr.bf16.mxu0 0
        %482 = vmatmul.mubr.bf16.gmra.mxu0 %v406
        %v483 = vpop.f32.mrf.mxu0
        %v484 = vadd.f32 %v336, %v483
        %v485 = vpop.f32.mrf.mxu0
        %v486 = vpop.f32.mrf.mxu0
        %v487 = vpop.f32.mrf.mxu0
        %488 = vdwg.mxu0
        %v489 = vmax.f32 %v443, 0.0
        %v490 = vmax.f32 %v445, 0.0
        %v491 = vmax.f32 %v484, 0.0
        %v492 = vpack.c.bf16 %v489, %v489
        %v493 = vpack.c.bf16 %v490, %v490
        %v494 = vpack.c.bf16 %v491, %v491
        %v495 = vld [vmem:[#allocation5] sm:$0xf]
        %v496 = vld [vmem:[#allocation5 + $0x4] sm:$0xf]
        %v497 = vld [vmem:[#allocation5 + $0x8] sm:$0xf]
        %v498 = vld [vmem:[#allocation5 + $0xc] sm:$0xf]
        %v499 = vld [vmem:[#allocation5 + $0x10] sm:$0xf]
        %v500 = vld [vmem:[#allocation5 + $0x14] sm:$0xf]
        %v501 = vld [vmem:[#allocation5 + $0x18] sm:$0xf]
        %v502 = vld [vmem:[#allocation5 + $0x1c] sm:$0xf]
        %v503 = vld [vmem:[#allocation5 + $0x20] sm:$0xf]
        %v504 = vld [vmem:[#allocation5 + $0x24] sm:$0xf]
        %v505 = vld [vmem:[#allocation5 + $0x28] sm:$0xf]
        %v506 = vld [vmem:[#allocation5 + $0x2c] sm:$0xf]
        %v507 = vld [vmem:[#allocation5 + $0x30] sm:$0xf]
        %v508 = vld [vmem:[#allocation5 + $0x34] sm:$0xf]
        %v509 = vld [vmem:[#allocation5 + $0x38] sm:$0xf]
        %v510 = vld [vmem:[#allocation5 + $0x3c] sm:$0xf]
        %v511 = vld [vmem:[#allocation5 + $0x40] sm:$0xf]
        %v512 = vld [vmem:[#allocation5 + $0x44] sm:$0xf]
        %v513 = vld [vmem:[#allocation5 + $0x48] sm:$0xf]
        %v514 = vld [vmem:[#allocation5 + $0x4c] sm:$0xf]
        %v515 = vld [vmem:[#allocation5 + $0x50] sm:$0xf]
        %v516 = vld [vmem:[#allocation5 + $0x54] sm:$0xf]
        %v517 = vld [vmem:[#allocation5 + $0x58] sm:$0xf]
        %v518 = vld [vmem:[#allocation5 + $0x5c] sm:$0xf]
        %v519 = vld [vmem:[#allocation5 + $0x60] sm:$0xf]
        %v520 = vld [vmem:[#allocation5 + $0x64] sm:$0xf]
        %v521 = vld [vmem:[#allocation5 + $0x68] sm:$0xf]
        %v522 = vld [vmem:[#allocation5 + $0x6c] sm:$0xf]
        %v523 = vld [vmem:[#allocation5 + $0x70] sm:$0xf]
        %v524 = vld [vmem:[#allocation5 + $0x74] sm:$0xf]
        %v525 = vld [vmem:[#allocation5 + $0x78] sm:$0xf]
        %v526 = vld [vmem:[#allocation5 + $0x7c] sm:$0xf]
        %v527 = vld [vmem:[#allocation5 + $0x80] sm:$0xf]
        %v528 = vld [vmem:[#allocation5 + $0x84] sm:$0xf]
        %v529 = vld [vmem:[#allocation5 + $0x88] sm:$0xf]
        %v530 = vld [vmem:[#allocation5 + $0x8c] sm:$0xf]
        %v531 = vld [vmem:[#allocation5 + $0x90] sm:$0xf]
        %v532 = vld [vmem:[#allocation5 + $0x94] sm:$0xf]
        %v533 = vld [vmem:[#allocation5 + $0x98] sm:$0xf]
        %v534 = vld [vmem:[#allocation5 + $0x9c] sm:$0xf]
        %v535 = vld [vmem:[#allocation5 + $0xa0] sm:$0xf]
        %v536 = vld [vmem:[#allocation5 + $0xa4] sm:$0xf]
        %v537 = vld [vmem:[#allocation5 + $0xa8] sm:$0xf]
        %v538 = vld [vmem:[#allocation5 + $0xac] sm:$0xf]
        %v539 = vld [vmem:[#allocation5 + $0xb0] sm:$0xf]
        %v540 = vld [vmem:[#allocation5 + $0xb4] sm:$0xf]
        %v541 = vld [vmem:[#allocation5 + $0xb8] sm:$0xf]
        %v542 = vld [vmem:[#allocation5 + $0xbc] sm:$0xf]
        %v543 = vld [vmem:[%s4] sm:$0x1]
        %v545 = vlaneseq
        %v546 = vshrl.u32 %v545, 7
        %v547 = vsub.s32 0, %v546
        %v548 = vrot.slane %v543, %v547
        %v598 = vunpack.c.l.b16 %v495
        %v599 = vunpack.c.l.b16 %v496
        %v600 = vunpack.c.l.b16 %v497
        %v601 = vunpack.c.l.b16 %v498
        %v602 = vunpack.c.l.b16 %v499
        %v603 = vunpack.c.l.b16 %v500
        %v604 = vunpack.c.l.b16 %v501
        %v605 = vunpack.c.l.b16 %v502
        %v606 = vunpack.c.l.b16 %v503
        %v607 = vunpack.c.l.b16 %v504
        %v608 = vunpack.c.l.b16 %v505
        %v609 = vunpack.c.l.b16 %v506
        %v610 = vunpack.c.l.b16 %v507
        %v611 = vunpack.c.l.b16 %v508
        %v612 = vunpack.c.l.b16 %v509
        %v613 = vunpack.c.l.b16 %v510
        %v614 = vunpack.c.l.b16 %v511
        %v615 = vunpack.c.l.b16 %v512
        %v616 = vunpack.c.l.b16 %v513
        %v617 = vunpack.c.l.b16 %v514
        %v618 = vunpack.c.l.b16 %v515
        %v619 = vunpack.c.l.b16 %v516
        %v620 = vunpack.c.l.b16 %v517
        %v621 = vunpack.c.l.b16 %v518
        %v622 = vunpack.c.l.b16 %v519
        %v623 = vunpack.c.l.b16 %v520
        %v624 = vunpack.c.l.b16 %v521
        %v625 = vunpack.c.l.b16 %v522
        %v626 = vunpack.c.l.b16 %v523
        %v627 = vunpack.c.l.b16 %v524
        %v628 = vunpack.c.l.b16 %v525
        %v629 = vunpack.c.l.b16 %v526
        %v630 = vunpack.c.l.b16 %v527
        %v631 = vunpack.c.l.b16 %v528
        %v632 = vunpack.c.l.b16 %v529
        %v633 = vunpack.c.l.b16 %v530
        %v634 = vunpack.c.l.b16 %v531
        %v635 = vunpack.c.l.b16 %v532
        %v636 = vunpack.c.l.b16 %v533
        %v637 = vunpack.c.l.b16 %v534
        %v638 = vunpack.c.l.b16 %v535
        %v639 = vunpack.c.l.b16 %v536
        %v640 = vunpack.c.l.b16 %v537
        %v641 = vunpack.c.l.b16 %v538
        %v642 = vunpack.c.l.b16 %v539
        %v643 = vunpack.c.l.b16 %v540
        %v644 = vunpack.c.l.b16 %v541
        %v645 = vunpack.c.l.b16 %v542
        %v646 = vpack.c.b16 %v599, %v598
        %v647 = vpack.c.b16 %v601, %v600
        %v648 = vpack.c.b16 %v603, %v602
        %v649 = vpack.c.b16 %v605, %v604
        %v650 = vpack.c.b16 %v607, %v606
        %v651 = vpack.c.b16 %v609, %v608
        %v652 = vpack.c.b16 %v611, %v610
        %v653 = vpack.c.b16 %v613, %v612
        %v654 = vpack.c.b16 %v615, %v614
        %v655 = vpack.c.b16 %v617, %v616
        %v656 = vpack.c.b16 %v619, %v618
        %v657 = vpack.c.b16 %v621, %v620
        %v658 = vpack.c.b16 %v623, %v622
        %v659 = vpack.c.b16 %v625, %v624
        %v660 = vpack.c.b16 %v627, %v626
        %v661 = vpack.c.b16 %v629, %v628
        %v662 = vpack.c.b16 %v631, %v630
        %v663 = vpack.c.b16 %v633, %v632
        %v664 = vpack.c.b16 %v635, %v634
        %v665 = vpack.c.b16 %v637, %v636
        %v666 = vpack.c.b16 %v639, %v638
        %v667 = vpack.c.b16 %v641, %v640
        %v668 = vpack.c.b16 %v643, %v642
        %v669 = vpack.c.b16 %v645, %v644
        %694 = vmatprep.subr.bf16.mxu0 0
        %695 = vmatpush1.bf16.msra.mxu0 %v653
        %696 = vmatprep.subr.bf16.mxu0 0
        %697 = vmatpush1.bf16.msra.mxu0 %v652
        %698 = vmatprep.subr.bf16.mxu0 0
        %699 = vmatpush1.bf16.msra.mxu0 %v651
        %700 = vmatprep.subr.bf16.mxu0 0
        %701 = vmatpush1.bf16.msra.mxu0 %v650
        %702 = vmatprep.subr.bf16.mxu0 0
        %703 = vmatpush1.bf16.msra.mxu0 %v649
        %704 = vmatprep.subr.bf16.mxu0 0
        %705 = vmatpush1.bf16.msra.mxu0 %v648
        %706 = vmatprep.subr.bf16.mxu0 0
        %707 = vmatpush1.bf16.msra.mxu0 %v647
        %708 = vmatprep.subr.bf16.mxu0 0
        %709 = vmatpush1.bf16.msra.mxu0 %v646
        %710 = vmatprep.subr.bf16.mxu0 0
        %711 = vmatpush2.bf16.msra.mxu0 %v661
        %712 = vmatprep.subr.bf16.mxu0 0
        %713 = vmatpush2.bf16.msra.mxu0 %v660
        %714 = vmatprep.subr.bf16.mxu0 0
        %715 = vmatpush2.bf16.msra.mxu0 %v659
        %716 = vmatprep.subr.bf16.mxu0 0
        %717 = vmatpush2.bf16.msra.mxu0 %v658
        %718 = vmatprep.subr.bf16.mxu0 0
        %719 = vmatpush2.bf16.msra.mxu0 %v657
        %720 = vmatprep.subr.bf16.mxu0 0
        %721 = vmatpush2.bf16.msra.mxu0 %v656
        %722 = vmatprep.subr.bf16.mxu0 0
        %723 = vmatpush2.bf16.msra.mxu0 %v655
        %724 = vmatprep.subr.bf16.mxu0 0
        %725 = vmatpush2.bf16.msra.mxu0 %v654
        %726 = vmatprep.mubr.bf16.mxu0 %v493
        %727 = vmatmul.mubr.bf16.gmra.mxu0 %v492
        %v728 = vpop.f32.mrf.mxu0
        %v729 = vadd.f32 %v548, %v728
        %v730 = vpop.f32.mrf.mxu0
        %v731 = vpop.f32.mrf.mxu0
        %v732 = vpop.f32.mrf.mxu0
        %733 = vdwg.mxu0
        %734 = vmatprep.subr.bf16.mxu0 0
        %735 = vmatpush1.bf16.msra.mxu0 %v669
        %736 = vmatprep.subr.bf16.mxu0 0
        %737 = vmatpush1.bf16.msra.mxu0 %v668
        %738 = vmatprep.subr.bf16.mxu0 0
        %739 = vmatpush1.bf16.msra.mxu0 %v667
        %740 = vmatprep.subr.bf16.mxu0 0
        %741 = vmatpush1.bf16.msra.mxu0 %v666
        %742 = vmatprep.subr.bf16.mxu0 0
        %743 = vmatpush1.bf16.msra.mxu0 %v665
        %744 = vmatprep.subr.bf16.mxu0 0
        %745 = vmatpush1.bf16.msra.mxu0 %v664
        %746 = vmatprep.subr.bf16.mxu0 0
        %747 = vmatpush1.bf16.msra.mxu0 %v663
        %748 = vmatprep.subr.bf16.mxu0 0
        %749 = vmatpush1.bf16.msra.mxu0 %v662
        %750 = vmatprep.subr.bf16.mxu0 0
        %751 = vmatpush2.bf16.msra.mxu0 0
        %752 = vmatprep.subr.bf16.mxu0 0
        %753 = vmatpush2.bf16.msra.mxu0 0
        %754 = vmatprep.subr.bf16.mxu0 0
        %755 = vmatpush2.bf16.msra.mxu0 0
        %756 = vmatprep.subr.bf16.mxu0 0
        %757 = vmatpush2.bf16.msra.mxu0 0
        %758 = vmatprep.subr.bf16.mxu0 0
        %759 = vmatpush2.bf16.msra.mxu0 0
        %760 = vmatprep.subr.bf16.mxu0 0
        %761 = vmatpush2.bf16.msra.mxu0 0
        %762 = vmatprep.subr.bf16.mxu0 0
        %763 = vmatpush2.bf16.msra.mxu0 0
        %764 = vmatprep.subr.bf16.mxu0 0
        %765 = vmatpush2.bf16.msra.mxu0 0
        %766 = vmatprep.mubr.bf16.mxu0 0
        %767 = vmatmul.mubr.bf16.gmra.mxu0 %v494
        %v768 = vpop.f32.mrf.mxu0
        %v769 = vadd.f32 %v729, %v768
        %v770 = vpop.f32.mrf.mxu0
        %v771 = vpop.f32.mrf.mxu0
        %v772 = vpop.f32.mrf.mxu0
        %773 = vdwg.mxu0
        %v774 = vmax.f32 %v769, 0.0
        %v775 = vpack.c.bf16 %v774, %v774
        %v776 = vld [vmem:[%s5] sm:$0xf]
        %v777 = vld [vmem:[%s5 + $0x4] sm:$0xf]
        %v778 = vld [vmem:[%s5 + $0x8] sm:$0xf]
        %v779 = vld [vmem:[%s5 + $0xc] sm:$0xf]
        %v780 = vld [vmem:[%s5 + $0x10] sm:$0xf]
        %v781 = vld [vmem:[%s5 + $0x14] sm:$0xf]
        %v782 = vld [vmem:[%s5 + $0x18] sm:$0xf]
        %v783 = vld [vmem:[%s5 + $0x1c] sm:$0xf]
        %v784 = vld [vmem:[%s5 + $0x20] sm:$0xf]
        %v785 = vld [vmem:[%s5 + $0x24] sm:$0xf]
        %v786 = vld [vmem:[%s5 + $0x28] sm:$0xf]
        %v787 = vld [vmem:[%s5 + $0x2c] sm:$0xf]
        %v788 = vld [vmem:[%s5 + $0x30] sm:$0xf]
        %v789 = vld [vmem:[%s5 + $0x34] sm:$0xf]
        %v790 = vld [vmem:[%s5 + $0x38] sm:$0xf]
        %v791 = vld [vmem:[%s5 + $0x3c] sm:$0xf]
        %v792 = vld [vmem:[%s6] sm:$0x1]
        %v794 = vlaneseq
        %v795 = vshrl.u32 %v794, 7
        %v796 = vsub.s32 0, %v795
        %v797 = vrot.slane %v792, %v796
        %v815 = vunpack.c.l.b16 %v776
        %v816 = vunpack.c.l.b16 %v777
        %v817 = vunpack.c.l.b16 %v778
        %v818 = vunpack.c.l.b16 %v779
        %v819 = vunpack.c.l.b16 %v780
        %v820 = vunpack.c.l.b16 %v781
        %v821 = vunpack.c.l.b16 %v782
        %v822 = vunpack.c.l.b16 %v783
        %v823 = vunpack.c.l.b16 %v784
        %v824 = vunpack.c.l.b16 %v785
        %v825 = vunpack.c.l.b16 %v786
        %v826 = vunpack.c.l.b16 %v787
        %v827 = vunpack.c.l.b16 %v788
        %v828 = vunpack.c.l.b16 %v789
        %v829 = vunpack.c.l.b16 %v790
        %v830 = vunpack.c.l.b16 %v791
        %v831 = vpack.c.b16 %v816, %v815
        %v832 = vpack.c.b16 %v818, %v817
        %v833 = vpack.c.b16 %v820, %v819
        %v834 = vpack.c.b16 %v822, %v821
        %v835 = vpack.c.b16 %v824, %v823
        %v836 = vpack.c.b16 %v826, %v825
        %v837 = vpack.c.b16 %v828, %v827
        %v838 = vpack.c.b16 %v830, %v829
        %847 = vmatprep.subr.bf16.mxu0 0
        %848 = vmatpush1.bf16.msra.mxu0 %v838
        %849 = vmatprep.subr.bf16.mxu0 0
        %850 = vmatpush1.bf16.msra.mxu0 %v837
        %851 = vmatprep.subr.bf16.mxu0 0
        %852 = vmatpush1.bf16.msra.mxu0 %v836
        %853 = vmatprep.subr.bf16.mxu0 0
        %854 = vmatpush1.bf16.msra.mxu0 %v835
        %855 = vmatprep.subr.bf16.mxu0 0
        %856 = vmatpush1.bf16.msra.mxu0 %v834
        %857 = vmatprep.subr.bf16.mxu0 0
        %858 = vmatpush1.bf16.msra.mxu0 %v833
        %859 = vmatprep.subr.bf16.mxu0 0
        %860 = vmatpush1.bf16.msra.mxu0 %v832
        %861 = vmatprep.subr.bf16.mxu0 0
        %862 = vmatpush1.bf16.msra.mxu0 %v831
        %863 = vmatprep.subr.bf16.mxu0 0
        %864 = vmatpush2.bf16.msra.mxu0 0
        %865 = vmatprep.subr.bf16.mxu0 0
        %866 = vmatpush2.bf16.msra.mxu0 0
        %867 = vmatprep.subr.bf16.mxu0 0
        %868 = vmatpush2.bf16.msra.mxu0 0
        %869 = vmatprep.subr.bf16.mxu0 0
        %870 = vmatpush2.bf16.msra.mxu0 0
        %871 = vmatprep.subr.bf16.mxu0 0
        %872 = vmatpush2.bf16.msra.mxu0 0
        %873 = vmatprep.subr.bf16.mxu0 0
        %874 = vmatpush2.bf16.msra.mxu0 0
        %875 = vmatprep.subr.bf16.mxu0 0
        %876 = vmatpush2.bf16.msra.mxu0 0
        %877 = vmatprep.subr.bf16.mxu0 0
        %878 = vmatpush2.bf16.msra.mxu0 0
        %879 = vmatprep.mubr.bf16.mxu0 0
        %880 = vmatmul.mubr.bf16.gmra.mxu0 %v775
        %v881 = vpop.f32.mrf.mxu0
        %v882 = vadd.f32 %v797, %v881
        %v883 = vpop.f32.mrf.mxu0
        %v884 = vpop.f32.mrf.mxu0
        %v885 = vpop.f32.mrf.mxu0
        %886 = vdwg.mxu0
        %887 = vst [vmem:[%s299] sm:$0xff] %v882
        %s888 = sand.u32 %s183, 1
        %s889 = scalar_lea.sflag [#allocation4], %s888
        %s890 = sand.u32 %s183, 1
        %s891 = smul.addr %s890, 8
        %s892 = scalar_lea.vmem [#allocation7], %s891
        // Predicated region
        $region57: #{noisy_mlp1_forward.1} parent=47 // pred_check
          %p893 = pneg %p193
        $region58: #{noisy_mlp1_forward.1} parent=47 // pred_check_branch
          %895 = sbr.rel (%p893) target = $region60
        $region59: #{noisy_mlp1_forward.1} parent=47 // pred_region
          %s897 = ssub.s32 128, 128
          %898 = vsyncadd %s889, %s897
          %s899 = smul.addr %s23, 128
          %s900 = scalar_lea.hbm %s7, %s899
          %s902 = sshll.u32 %s892, 4
          %s903 = int_to_ptr.vmem [resolvable:$true] %s902
          %905 = dma.vmem_to_hbm [thread:$0]  %s903, 128, %s900, %s889
        $region60: #{noisy_mlp1_forward.1} parent=47 // pred_fallthru
          _
      $region48: #{noisy_mlp1_forward.1} parent=5 // pred_fallthru
        _
      %p906 = scmp.le.s32.totalorder 2, %s18
      // Predicated region
      $region61: #{noisy_mlp1_forward.1} parent=5 // pred_check
        %p907 = pneg %p906
      $region62: #{noisy_mlp1_forward.1} parent=5 // pred_check_branch
        %909 = sbr.rel (%p907) target = $region64
      $region63: #{noisy_mlp1_forward.1} parent=5 // pred_region
        %s910 = ssub.s32 %s18, 2
        // Predicated region
        $region65: #{noisy_mlp1_forward.1} parent=63 // pred_check
          %p911 = pneg %p199
        $region66: #{noisy_mlp1_forward.1} parent=63 // pred_check_branch
          %913 = sbr.rel (%p911) target = $region68
        $region67: #{noisy_mlp1_forward.1} parent=63 // pred_region
          %s914 = sand.u32 %s184, 1
          %s915 = scalar_lea.sflag [#allocation4], %s914
          %s916 = sand.u32 %s184, 1
          %s917 = smul.addr %s916, 8
          %s918 = scalar_lea.vmem [#allocation7], %s917
          %919 = dma.done %s915, 128
        $region68: #{noisy_mlp1_forward.1} parent=63 // pred_fallthru
          _
      $region64: #{noisy_mlp1_forward.1} parent=5 // pred_fallthru
        _
    $region6: #{noisy_mlp1_forward.1} parent=1 // loop_footer
      %s22 = sadd.s32 1, %s18
    $region7: #{noisy_mlp1_forward.1} parent=1 // loop_footer_branch
      %17 = sbr.rel target = $region3
    $region8: #{noisy_mlp1_forward.1} parent=1 // loop_exit
      _
    %920 = vsyncpa [#allocation3], 1
    %s921 = scalar_lea.sflag [#allocation3], 1
    %922 = vsyncpa %s921, 1
    %923 = vsyncpa [#allocation6], 1
    %924 = vsyncpa [#allocation4], 1
    %s925 = scalar_lea.sflag [#allocation4], 1
    %926 = vsyncpa %s925, 1

</llo_original>
